<compile_context>
chip_gen: v7x
topology: tpu7x:2x2x1
jax: 0.10.0
libtpu: 0.0.40
codegen_flags: <defaults>
</compile_context>

<pallas_src>
import functools

import jax
import jax.numpy as jnp
from jax.experimental import pallas as pl
from jax.experimental.pallas import tpu as pltpu


def _round_up(x, m):
    return ((x + m - 1) // m) * m


def _vmem_budget():
    """(vmem_limit_bytes, physical_capacity). ~cap/2, clamped to [32, 96] MiB."""
    try:
        cap = int(pltpu.get_tpu_info().vmem_capacity_bytes)
    except Exception:
        cap = 64 * 1024 * 1024
    limit = max(32 * 1024 * 1024, min(96 * 1024 * 1024, cap // 2))
    return limit, cap


# ---------------------------------------------------------------------------
# Single-pass kernel: whole (C, HW) slab per batch (reads c/t/m once).
# ---------------------------------------------------------------------------
def _fused_kernel(c_ref, t_ref, m_ref,
                  wfT_ref, bf_ref, wc_ref, bc_ref, wt_ref, bt_ref,
                  o_ref, *, inv_hw):
    c = c_ref[...].astype(jnp.float32)            # (C, HW)
    t = t_ref[...].astype(jnp.float32)            # (C, HW)
    m = m_ref[...].astype(jnp.float32)            # (1, HW) -> broadcasts over C
    fea1 = c * m                                  # c_fea * mask
    fea2 = t - m                                  # t_fea * 1 - mask (precedence quirk)
    # squeeze: spatial mean of fea_u = fea1 + fea2
    s = jnp.sum(fea1 + fea2, axis=-1, keepdims=True) * inv_hw            # (C, 1)
    # fc -> fc_c / fc_t: tiny, VPU broadcast-mul + reductions (no MXU needed).
    z = jnp.sum(wfT_ref[...] * s, axis=0, keepdims=True) + bf_ref[...]   # (1, d)
    vc = jnp.sum(wc_ref[...] * z, axis=1, keepdims=True) + bc_ref[...]   # (C, 1)
    vt = jnp.sum(wt_ref[...] * z, axis=1, keepdims=True) + bt_ref[...]   # (C, 1)
    # softmax over the 2-branch axis (dropout p=0 -> identity)
    mx = jnp.maximum(vc, vt)
    ec = jnp.exp(vc - mx)
    et = jnp.exp(vt - mx)
    den = ec + et
    a_c = ec / den
    a_t = et / den
    o_ref[...] = (fea1 * a_c + fea2 * a_t).astype(o_ref.dtype)


# ---------------------------------------------------------------------------
# Two-pass path, pass 1: partial spatial sums of fea_u over HW tiles.
# ---------------------------------------------------------------------------
def _reduce_kernel(c_ref, t_ref, m_ref, o_ref, *, ntps, T, HW):
    si = pl.program_id(0)
    ti = pl.program_id(2)

    @pl.when(ti == 0)
    def _():
        o_ref[...] = jnp.zeros_like(o_ref)

    # Global lane index of this tile; masks the ragged last tile AND the
    # (clamped) ghost tiles of the shorter HW-split to zero contribution.
    tile_idx = si * ntps + ti
    start = tile_idx * T
    lane = jax.lax.broadcasted_iota(jnp.int32, c_ref.shape, 1)   # (C, T)
    valid = (start + lane) < HW

    c = c_ref[...].astype(jnp.float32)            # (C, T)
    t = t_ref[...].astype(jnp.float32)            # (C, T)
    m = m_ref[...].astype(jnp.float32)            # (1, T)
    fea_u = jnp.where(valid, c * m + t - m, 0.0)  # fea1 + fea2
    o_ref[...] += jnp.sum(fea_u, axis=-1, keepdims=True)         # (C, 1)


# ---------------------------------------------------------------------------
# Two-pass path, pass 2: apply packed attention weights tile-by-tile.
# ---------------------------------------------------------------------------
def _apply_kernel(c_ref, t_ref, m_ref, att_ref, o_ref):
    c = c_ref[...].astype(jnp.float32)            # (C, T)
    t = t_ref[...].astype(jnp.float32)
    m = m_ref[...].astype(jnp.float32)            # (1, T)
    a_c = att_ref[:, 0:1]                         # (C, 1) f32
    a_t = att_ref[:, 1:2]
    fea1 = c * m
    fea2 = t - m                                  # t_fea * 1 - mask
    # Ragged last tile: garbage input lanes compute garbage, but Pallas masks
    # the out-of-bounds part of the edge store automatically.
    o_ref[...] = (fea1 * a_c + fea2 * a_t).astype(o_ref.dtype)


def feature_fusion_pallas(c_fea, t_fea, mask, params, *,
                          force_two_pass=False, tile_lanes=None):
    """c_fea, t_fea: (B, C, H, W); mask: (B, 1, h0, w0). Returns (B, C, H, W)."""
    B, C, H, W = c_fea.shape
    HW = H * W
    out_dtype = c_fea.dtype
    d = params["wf"].shape[0]

    # F.interpolate(mask, size=[H, W], mode='nearest') -- index glue, native dtype.
    _, _, h0, w0 = mask.shape
    ri = (jnp.arange(H) * h0) // H
    ci = (jnp.arange(W) * w0) // W
    mask_r = mask[:, :, ri[:, None], ci[None, :]]            # (B, 1, H, W)

    # Flatten spatial dims -- free reshapes, no padding, no output slice.
    c2 = c_fea.reshape(B, C, HW)
    t2 = t_fea.reshape(B, C, HW)
    m2 = mask_r.reshape(B, 1, HW)

    wf = params["wf"].astype(jnp.float32)                    # (d, C)
    bf = params["bf"].astype(jnp.float32)                    # (d,)
    wc = params["wc"].astype(jnp.float32)                    # (C, d)
    bc = params["bc"].astype(jnp.float32)                    # (C,)
    wt = params["wt"].astype(jnp.float32)                    # (C, d)
    bt = params["bt"].astype(jnp.float32)                    # (C,)

    in_bytes = jnp.dtype(c_fea.dtype).itemsize
    out_bytes = jnp.dtype(out_dtype).itemsize
    vmem_limit, vmem_cap = _vmem_budget()

    # ---------------- single-pass path: one batch slab fits VMEM comfortably.
    # Budget: double-buffered c/t/m inputs + double-buffered out + f32 temps.
    est_single = C * HW * (4 * in_bytes + 2 * out_bytes + 16) + 4 * HW * in_bytes
    if (not force_two_pass) and est_single <= int(0.6 * vmem_limit):
        out = pl.pallas_call(
            functools.partial(_fused_kernel, inv_hw=1.0 / float(HW)),
            out_shape=jax.ShapeDtypeStruct((B, C, HW), out_dtype),
            grid=(B,),
            in_specs=[
                pl.BlockSpec((None, C, HW), lambda b: (b, 0, 0)),   # c_fea
                pl.BlockSpec((None, C, HW), lambda b: (b, 0, 0)),   # t_fea
                pl.BlockSpec((None, 1, HW), lambda b: (b, 0, 0)),   # mask
                pl.BlockSpec((C, d), lambda b: (0, 0)),             # fc weight^T
                pl.BlockSpec((1, d), lambda b: (0, 0)),             # fc bias
                pl.BlockSpec((C, d), lambda b: (0, 0)),             # fc_c weight
                pl.BlockSpec((C, 1), lambda b: (0, 0)),             # fc_c bias
                pl.BlockSpec((C, d), lambda b: (0, 0)),             # fc_t weight
                pl.BlockSpec((C, 1), lambda b: (0, 0)),             # fc_t bias
            ],
            out_specs=pl.BlockSpec((None, C, HW), lambda b: (b, 0, 0)),
            compiler_params=pltpu.CompilerParams(
                dimension_semantics=("parallel",),
                vmem_limit_bytes=vmem_limit),
        )(c2, t2, m2, wf.T, bf.reshape(1, d), wc, bc.reshape(C, 1),
          wt, bt.reshape(C, 1))
        return out.reshape(B, C, H, W)

    # ---------------- two-pass tiled path.
    # Lane tile: dtype- & operand-count-aware.  Pass 2 double-buffers three big
    # operands (c, t, out) plus mask, and keeps a few f32 temps per lane.
    per_lane = C * (6 * in_bytes + 12) + 2 * in_bytes
    budget = vmem_limit // 2
    T = (max(budget // per_lane, 128) // 128) * 128
    if tile_lanes is not None:
        T = min(T, max(128, (tile_lanes // 128) * 128))
    T = min(T, _round_up(HW, 128))
    # Safeguard for extreme C: guarantee one tile set fits under the limit.
    vmem_limit = min(int(0.9 * vmem_cap), max(vmem_limit, per_lane * T + (4 << 20)))

    nt = pl.cdiv(HW, T)

    # Pass 1 parallelism: batches if B >= 2, otherwise split the HW tile range
    # into two independently reduced halves so v7x's second TC isn't idle.
    nsplit = 1 if (B >= 2 or nt < 2) else 2
    ntps = pl.cdiv(nt, nsplit)

    def _tile_map(si, bi, ti):
        # Clamp ghost tiles (shorter split) to the last real tile; their
        # contribution is masked to zero inside the kernel.
        return (bi, 0, jnp.minimum(si * ntps + ti, nt - 1))

    partial_sums = pl.pallas_call(
        functools.partial(_reduce_kernel, ntps=ntps, T=T, HW=HW),
        out_shape=jax.ShapeDtypeStruct((nsplit, B, C, 1), jnp.float32),
        grid=(nsplit, B, ntps),
        in_specs=[
            pl.BlockSpec((None, C, T), _tile_map),
            pl.BlockSpec((None, C, T), _tile_map),
            pl.BlockSpec((None, 1, T), _tile_map),
        ],
        out_specs=pl.BlockSpec((None, None, C, 1),
                               lambda si, bi, ti: (si, bi, 0, 0)),
        compiler_params=pltpu.CompilerParams(
            dimension_semantics=("parallel", "parallel", "arbitrary"),
            vmem_limit_bytes=vmem_limit),
    )(c2, t2, m2)

    # Tiny squeeze/excite FCs + 2-way softmax on (B, C): wrapper-side JAX glue
    # (negligible bytes/flops; dropout p=0 -> identity).
    fea_s = partial_sums.sum(axis=0)[..., 0] * (1.0 / float(HW))   # (B, C)
    z = fea_s @ wf.T + bf                                          # (B, d)
    vc = z @ wc.T + bc
    vt = z @ wt.T + bt
    mx = jnp.maximum(vc, vt)
    ec = jnp.exp(vc - mx)
    et = jnp.exp(vt - mx)
    den = ec + et
    att = jnp.stack([ec / den, et / den], axis=-1).astype(jnp.float32)  # (B, C, 2)

    out = pl.pallas_call(
        _apply_kernel,
        out_shape=jax.ShapeDtypeStruct((B, C, HW), out_dtype),
        grid=(B, nt),
        in_specs=[
            pl.BlockSpec((None, C, T), lambda bi, ti: (bi, 0, ti)),
            pl.BlockSpec((None, C, T), lambda bi, ti: (bi, 0, ti)),
            pl.BlockSpec((None, 1, T), lambda bi, ti: (bi, 0, ti)),
            pl.BlockSpec((None, C, 2), lambda bi, ti: (bi, 0, 0)),  # packed a_c/a_t
        ],
        out_specs=pl.BlockSpec((None, C, T), lambda bi, ti: (bi, 0, ti)),
        compiler_params=pltpu.CompilerParams(
            dimension_semantics=("parallel", "parallel"),
            vmem_limit_bytes=vmem_limit),
    )(c2, t2, m2, att)

    return out.reshape(B, C, H, W)


def feature_fusion_ref(c_fea, t_fea, mask, params):
    """Pure-JAX reference mirroring the PyTorch forward."""
    B, C, H, W = c_fea.shape
    _, _, h0, w0 = mask.shape
    ri = (jnp.arange(H) * h0) // H
    ci = (jnp.arange(W) * w0) // W
    m = mask[:, :, ri[:, None], ci[None, :]]
    m = jnp.broadcast_to(m, (B, C, H, W))
    fea1 = c_fea * m
    fea2 = t_fea - m
    fea_u = fea1 + fea2
    fea_s = fea_u.mean(axis=(-2, -1))
    z = fea_s @ params["wf"].T + params["bf"]
    vc = z @ params["wc"].T + params["bc"]
    vt = z @ params["wt"].T + params["bt"]
    vec = jax.nn.softmax(jnp.stack([vc, vt], axis=1), axis=1)
    a_c = vec[:, 0][:, :, None, None]
    a_t = vec[:, 1][:, :, None, None]
    return fea1 * a_c + fea2 * a_t


def init_params(key, feat):
    d = feat // 2
    ks = jax.random.split(key, 6)
    s = 0.1
    return {
        "wf": s * jax.random.normal(ks[0], (d, feat), jnp.float32),
        "bf": s * jax.random.normal(ks[1], (d,), jnp.float32),
        "wc": s * jax.random.normal(ks[2], (feat, d), jnp.float32),
        "bc": s * jax.random.normal(ks[3], (feat,), jnp.float32),
        "wt": s * jax.random.normal(ks[4], (feat, d), jnp.float32),
        "bt": s * jax.random.normal(ks[5], (feat,), jnp.float32),
    }


if __name__ == "__main__":
    key = jax.random.PRNGKey(0)
    k1, k2, k3, k4 = jax.random.split(key, 4)

    B, C, H, W = 2, 8, 16, 16                       # feat = C = 8, d = 4
    c_fea = jax.random.normal(k1, (B, C, H, W), jnp.float32)
    t_fea = jax.random.normal(k2, (B, C, H, W), jnp.float32)
    mask = (jax.random.uniform(k3, (B, 1, H // 2, W // 2)) > 0.5).astype(jnp.float32)
    params = init_params(k4, C)
    ref = feature_fusion_ref(c_fea, t_fea, mask, params)

    # 1) fused single-pass path (auto-selected at this size)
    out = jax.block_until_ready(feature_fusion_pallas(c_fea, t_fea, mask, params))
    assert out.shape == (B, C, H, W) and out.dtype == c_fea.dtype
    assert jnp.allclose(out, ref, atol=1e-4, rtol=1e-4), "single-pass f32 mismatch"

    # 2) tiled two-pass path, batch=1 (forced small tiles -> ragged last HW
    #    tile, multi-tile accumulation, and the B==1 HW-split parallel axis)
    B1, H1, W1 = 1, 20, 20
    c1 = jax.random.normal(k1, (B1, C, H1, W1), jnp.float32)
    t1 = jax.random.normal(k2, (B1, C, H1, W1), jnp.float32)
    m1 = (jax.random.uniform(k3, (B1, 1, H1 // 2, W1 // 2)) > 0.5).astype(jnp.float32)
    ref1 = feature_fusion_ref(c1, t1, m1, params)
    out1 = jax.block_until_ready(
        feature_fusion_pallas(c1, t1, m1, params, force_two_pass=True, tile_lanes=128))
    assert jnp.allclose(out1, ref1, atol=1e-4, rtol=1e-4), "two-pass (B=1) mismatch"

    # 3) tiled two-pass path, batch>=2 (parallel over batches)
    out2 = jax.block_until_ready(
        feature_fusion_pallas(c_fea, t_fea, mask, params,
                              force_two_pass=True, tile_lanes=128))
    assert jnp.allclose(out2, ref, atol=1e-4, rtol=1e-4), "two-pass (B=2) mismatch"

    # 4) bf16 end-to-end (halves HBM traffic; f32 math in-kernel)
    out_bf = jax.block_until_ready(feature_fusion_pallas(
        c_fea.astype(jnp.bfloat16), t_fea.astype(jnp.bfloat16),
        mask.astype(jnp.bfloat16), params))
    ref_bf = feature_fusion_ref(c_fea.astype(jnp.bfloat16).astype(jnp.float32),
                                t_fea.astype(jnp.bfloat16).astype(jnp.float32),
                                mask.astype(jnp.bfloat16).astype(jnp.float32), params)
    assert out_bf.dtype == jnp.bfloat16
    assert jnp.allclose(out_bf.astype(jnp.float32), ref_bf, atol=3e-2, rtol=3e-2), \
        "bf16 mismatch"

    print("KERNEL_OK")
</pallas_src>

<mosaic_0001>
module attributes {stable_mosaic.version = 11 : i64} {
  func.func @_fused_kernel(%arg0: i32, %arg1: memref<1x8x256xf32, #tpu.memory_space<vmem>>, %arg2: memref<1x8x256xf32, #tpu.memory_space<vmem>>, %arg3: memref<1x1x256xf32, #tpu.memory_space<vmem>>, %arg4: memref<8x4xf32, #tpu.memory_space<vmem>>, %arg5: memref<1x4xf32, #tpu.memory_space<vmem>>, %arg6: memref<8x4xf32, #tpu.memory_space<vmem>>, %arg7: memref<8x1xf32, #tpu.memory_space<vmem>>, %arg8: memref<8x4xf32, #tpu.memory_space<vmem>>, %arg9: memref<8x1xf32, #tpu.memory_space<vmem>>, %arg10: memref<1x8x256xf32, #tpu.memory_space<vmem>>) attributes {dimension_semantics = [#tpu.dimension_semantics<parallel>], iteration_bounds = array<i64: 2>, scalar_prefetch = 0 : i64, scratch_operands = 0 : i64, tpu.core_type = #tpu.core_type<tc>, window_params = [{transform_indices = @transform_0, window_bounds = array<i64: 1, 8, 256>}, {transform_indices = @transform_1, window_bounds = array<i64: 1, 8, 256>}, {transform_indices = @transform_2, window_bounds = array<i64: 1, 1, 256>}, {pipeline_mode = #tpu.pipeline_mode<synchronous>, transform_indices = @transform_3, window_bounds = array<i64: 8, 4>}, {pipeline_mode = #tpu.pipeline_mode<synchronous>, transform_indices = @transform_4, window_bounds = array<i64: 1, 4>}, {pipeline_mode = #tpu.pipeline_mode<synchronous>, transform_indices = @transform_5, window_bounds = array<i64: 8, 4>}, {pipeline_mode = #tpu.pipeline_mode<synchronous>, transform_indices = @transform_6, window_bounds = array<i64: 8, 1>}, {pipeline_mode = #tpu.pipeline_mode<synchronous>, transform_indices = @transform_7, window_bounds = array<i64: 8, 4>}, {pipeline_mode = #tpu.pipeline_mode<synchronous>, transform_indices = @transform_8, window_bounds = array<i64: 8, 1>}, {transform_indices = @transform_9, window_bounds = array<i64: 1, 8, 256>}]} {
    %c0 = arith.constant 0 : index
    %c0_0 = arith.constant 0 : index
    %c0_1 = arith.constant 0 : index
    %0 = vector.load %arg1[%c0, %c0_0, %c0_1] : memref<1x8x256xf32, #tpu.memory_space<vmem>>, vector<1x8x256xf32>
    %1 = vector.shape_cast %0 : vector<1x8x256xf32> to vector<8x256xf32>
    %c0_2 = arith.constant 0 : index
    %c0_3 = arith.constant 0 : index
    %c0_4 = arith.constant 0 : index
    %2 = vector.load %arg2[%c0_2, %c0_3, %c0_4] : memref<1x8x256xf32, #tpu.memory_space<vmem>>, vector<1x8x256xf32>
    %3 = vector.shape_cast %2 : vector<1x8x256xf32> to vector<8x256xf32>
    %c0_5 = arith.constant 0 : index
    %c0_6 = arith.constant 0 : index
    %c0_7 = arith.constant 0 : index
    %4 = vector.load %arg3[%c0_5, %c0_6, %c0_7] : memref<1x1x256xf32, #tpu.memory_space<vmem>>, vector<1x1x256xf32>
    %5 = vector.shape_cast %4 : vector<1x1x256xf32> to vector<1x256xf32>
    %6 = vector.broadcast %5 : vector<1x256xf32> to vector<8x256xf32>
    %7 = arith.mulf %1, %6 : vector<8x256xf32>
    %8 = vector.broadcast %5 : vector<1x256xf32> to vector<8x256xf32>
    %9 = arith.subf %3, %8 : vector<8x256xf32>
    %10 = arith.addf %7, %9 : vector<8x256xf32>
    %cst = arith.constant dense<0.000000e+00> : vector<8xf32>
    %11 = vector.multi_reduction <add>, %10, %cst [1] : vector<8x256xf32> to vector<8xf32>
    %12 = vector.shape_cast %11 : vector<8xf32> to vector<8x1xf32>
    %cst_8 = arith.constant 3.906250e-03 : f32
    %13 = vector.broadcast %cst_8 : f32 to vector<8x1xf32>
    %14 = arith.mulf %12, %13 : vector<8x1xf32>
    %c0_9 = arith.constant 0 : index
    %c0_10 = arith.constant 0 : index
    %15 = vector.load %arg4[%c0_9, %c0_10] : memref<8x4xf32, #tpu.memory_space<vmem>>, vector<8x4xf32>
    %16 = vector.broadcast %14 : vector<8x1xf32> to vector<8x4xf32>
    %17 = arith.mulf %15, %16 : vector<8x4xf32>
    %cst_11 = arith.constant dense<0.000000e+00> : vector<4xf32>
    %18 = vector.multi_reduction <add>, %17, %cst_11 [0] : vector<8x4xf32> to vector<4xf32>
    %19 = vector.shape_cast %18 : vector<4xf32> to vector<1x4xf32>
    %c0_12 = arith.constant 0 : index
    %c0_13 = arith.constant 0 : index
    %20 = vector.load %arg5[%c0_12, %c0_13] : memref<1x4xf32, #tpu.memory_space<vmem>>, vector<1x4xf32>
    %21 = arith.addf %19, %20 : vector<1x4xf32>
    %c0_14 = arith.constant 0 : index
    %c0_15 = arith.constant 0 : index
    %22 = vector.load %arg6[%c0_14, %c0_15] : memref<8x4xf32, #tpu.memory_space<vmem>>, vector<8x4xf32>
    %23 = vector.broadcast %21 : vector<1x4xf32> to vector<8x4xf32>
    %24 = arith.mulf %22, %23 : vector<8x4xf32>
    %cst_16 = arith.constant dense<0.000000e+00> : vector<8xf32>
    %25 = vector.multi_reduction <add>, %24, %cst_16 [1] : vector<8x4xf32> to vector<8xf32>
    %26 = vector.shape_cast %25 : vector<8xf32> to vector<8x1xf32>
    %c0_17 = arith.constant 0 : index
    %c0_18 = arith.constant 0 : index
    %27 = vector.load %arg7[%c0_17, %c0_18] : memref<8x1xf32, #tpu.memory_space<vmem>>, vector<8x1xf32>
    %28 = arith.addf %26, %27 : vector<8x1xf32>
    %c0_19 = arith.constant 0 : index
    %c0_20 = arith.constant 0 : index
    %29 = vector.load %arg8[%c0_19, %c0_20] : memref<8x4xf32, #tpu.memory_space<vmem>>, vector<8x4xf32>
    %30 = vector.broadcast %21 : vector<1x4xf32> to vector<8x4xf32>
    %31 = arith.mulf %29, %30 : vector<8x4xf32>
    %cst_21 = arith.constant dense<0.000000e+00> : vector<8xf32>
    %32 = vector.multi_reduction <add>, %31, %cst_21 [1] : vector<8x4xf32> to vector<8xf32>
    %33 = vector.shape_cast %32 : vector<8xf32> to vector<8x1xf32>
    %c0_22 = arith.constant 0 : index
    %c0_23 = arith.constant 0 : index
    %34 = vector.load %arg9[%c0_22, %c0_23] : memref<8x1xf32, #tpu.memory_space<vmem>>, vector<8x1xf32>
    %35 = arith.addf %33, %34 : vector<8x1xf32>
    %36 = arith.maximumf %28, %35 : vector<8x1xf32>
    %37 = arith.subf %28, %36 : vector<8x1xf32>
    %38 = math.exp %37 : vector<8x1xf32>
    %39 = arith.subf %35, %36 : vector<8x1xf32>
    %40 = math.exp %39 : vector<8x1xf32>
    %41 = arith.addf %38, %40 : vector<8x1xf32>
    %42 = arith.divf %38, %41 : vector<8x1xf32>
    %43 = arith.divf %40, %41 : vector<8x1xf32>
    %44 = vector.broadcast %42 : vector<8x1xf32> to vector<8x256xf32>
    %45 = arith.mulf %7, %44 : vector<8x256xf32>
    %46 = vector.broadcast %43 : vector<8x1xf32> to vector<8x256xf32>
    %47 = arith.mulf %9, %46 : vector<8x256xf32>
    %48 = arith.addf %45, %47 : vector<8x256xf32>
    %c0_24 = arith.constant 0 : index
    %c0_25 = arith.constant 0 : index
    %c0_26 = arith.constant 0 : index
    %49 = vector.load %arg10[%c0_24, %c0_25, %c0_26] : memref<1x8x256xf32, #tpu.memory_space<vmem>>, vector<1x8x256xf32>
    %50 = vector.shape_cast %49 : vector<1x8x256xf32> to vector<8x256xf32>
    %51 = vector.shape_cast %48 : vector<8x256xf32> to vector<1x8x256xf32>
    tpu.vector_store %arg10[%c0_24, %c0_25, %c0_26], %51 {strides = array<i32>} : memref<1x8x256xf32, #tpu.memory_space<vmem>>, vector<1x8x256xf32>,
    return
  }
  func.func @transform_0(%arg0: i32) -> (i32, i32, i32) {
    %c0_i32 = arith.constant 0 : i32
    %c0_i32_0 = arith.constant 0 : i32
    %c0_i32_1 = arith.constant 0 : i32
    return %arg0, %c0_i32, %c0_i32_0 : i32, i32, i32
  }
  func.func @transform_1(%arg0: i32) -> (i32, i32, i32) {
    %c0_i32 = arith.constant 0 : i32
    %c0_i32_0 = arith.constant 0 : i32
    %c0_i32_1 = arith.constant 0 : i32
    return %arg0, %c0_i32, %c0_i32_0 : i32, i32, i32
  }
  func.func @transform_2(%arg0: i32) -> (i32, i32, i32) {
    %c0_i32 = arith.constant 0 : i32
    %c0_i32_0 = arith.constant 0 : i32
    %c0_i32_1 = arith.constant 0 : i32
    return %arg0, %c0_i32, %c0_i32_0 : i32, i32, i32
  }
  func.func @transform_3(%arg0: i32) -> (i32, i32) {
    %c0_i32 = arith.constant 0 : i32
    %c0_i32_0 = arith.constant 0 : i32
    %c0_i32_1 = arith.constant 0 : i32
    return %c0_i32, %c0_i32_0 : i32, i32
  }
  func.func @transform_4(%arg0: i32) -> (i32, i32) {
    %c0_i32 = arith.constant 0 : i32
    %c0_i32_0 = arith.constant 0 : i32
    %c0_i32_1 = arith.constant 0 : i32
    return %c0_i32, %c0_i32_0 : i32, i32
  }
  func.func @transform_5(%arg0: i32) -> (i32, i32) {
    %c0_i32 = arith.constant 0 : i32
    %c0_i32_0 = arith.constant 0 : i32
    %c0_i32_1 = arith.constant 0 : i32
    return %c0_i32, %c0_i32_0 : i32, i32
  }
  func.func @transform_6(%arg0: i32) -> (i32, i32) {
    %c0_i32 = arith.constant 0 : i32
    %c0_i32_0 = arith.constant 0 : i32
    %c0_i32_1 = arith.constant 0 : i32
    return %c0_i32, %c0_i32_0 : i32, i32
  }
  func.func @transform_7(%arg0: i32) -> (i32, i32) {
    %c0_i32 = arith.constant 0 : i32
    %c0_i32_0 = arith.constant 0 : i32
    %c0_i32_1 = arith.constant 0 : i32
    return %c0_i32, %c0_i32_0 : i32, i32
  }
  func.func @transform_8(%arg0: i32) -> (i32, i32) {
    %c0_i32 = arith.constant 0 : i32
    %c0_i32_0 = arith.constant 0 : i32
    %c0_i32_1 = arith.constant 0 : i32
    return %c0_i32, %c0_i32_0 : i32, i32
  }
  func.func @transform_9(%arg0: i32) -> (i32, i32, i32) {
    %c0_i32 = arith.constant 0 : i32
    %c0_i32_0 = arith.constant 0 : i32
    %c0_i32_1 = arith.constant 0 : i32
    return %arg0, %c0_i32, %c0_i32_0 : i32, i32, i32
  }
}

</mosaic_0001>

<llo_original>
// kernel: tpu_custom_call.1
$region0: #{tpu_custom_call.1}
  #allocation0 [shape = 'u32[]', space=smem, size = 0x4, offset = 0x4, fixed_abs, tag = 'smem constant byte address 0x4 - core index']
  #allocation1 [shape = 'u32[144,128]{1,0:T(1,128)}', space=vmem, size = 0x12000, scoped, tag = 'internal scratch']
  %s0 = inlined_call_operand.vmem [shape: f32[2,8,256], index: 0, kind: input, shape index: {}]
  %s1 = inlined_call_operand.hbm [shape: f32[2,8,256], index: 1, kind: input, shape index: {}]
  %s2 = inlined_call_operand.vmem [shape: f32[2,1,256], index: 2, kind: input, shape index: {}]
  %s3 = inlined_call_operand.vmem [shape: f32[8,4], index: 3, kind: input, shape index: {}]
  %s4 = inlined_call_operand.vmem [shape: f32[1,4], index: 4, kind: input, shape index: {}]
  %s5 = inlined_call_operand.vmem [shape: f32[8,4], index: 5, kind: input, shape index: {}]
  %s6 = inlined_call_operand.vmem [shape: f32[8,1], index: 6, kind: input, shape index: {}]
  %s7 = inlined_call_operand.vmem [shape: f32[8,4], index: 7, kind: input, shape index: {}]
  %s8 = inlined_call_operand.vmem [shape: f32[8,1], index: 8, kind: input, shape index: {}]
  %s9 = inlined_call_operand.hbm [shape: f32[2,8,256], index: 9, kind: output, shape index: {}]
  %s10 = sld [smem:[#allocation0]]
  $region73: #{tpu_custom_call.1} parent=0
    _
  %s12 = ssub.s32 1, %s10
  %s13 = scalar_select 0, %s12, %s10
  $region1: #{tpu_custom_call.1} parent=0
    #allocation2 [shape = 'u8[16384]{0}', space=vmem, size = 0x4000, scoped, tag = 'input window, operand 1']
    #allocation3 [shape = 's32[2]{0}', space=sflag, size = 0x8, scoped, tag = 'scoped memory for tpu_custom_call.1']
    #allocation4 [shape = 's32[2]{0}', space=sflag, size = 0x8, scoped, tag = 'scoped memory for tpu_custom_call.1']
    #allocation5 [shape = 'u8[16384]{0}', space=vmem, size = 0x4000, scoped, tag = 'output window, operand 0']
    %14 = vsyncpa [#allocation3], 0
    %s15 = scalar_lea.sflag [#allocation3], 1
    %16 = vsyncpa %s15, 0
    %17 = vsyncpa [#allocation4], 0
    %s18 = scalar_lea.sflag [#allocation4], 1
    %19 = vsyncpa %s18, 0
    loop: start=0, step=1, limit=4
    $region2: #{tpu_custom_call.1} parent=1 // loop_pre_header
      _
    $region3: #{tpu_custom_call.1} parent=1 // loop_header
      %s21 = sphi 0, %s25
      %p22 = scmp.ge.s32.totalorder %s21, 4
      %s31 = sphi 0, %s33
      %s34 = sphi 0, %s31
      %s35 = sphi 0, %s34
      %s51 = sphi 0, %s35
      %s57 = sphi 0, %s59
      %s60 = sphi 0, %s57
      %s61 = sphi 0, %s60
      %s77 = sphi 0, %s61
      %s83 = sphi 0, %s85
      %s86 = sphi 0, %s83
      %s87 = sphi 0, %s86
      %s103 = sphi 0, %s87
      %s107 = sphi 0, %s107
      %s109 = sphi 0, %s107
      %s110 = sphi 0, %s109
      %s124 = sphi 0, %s110
      %s128 = sphi 0, %s128
      %s130 = sphi 0, %s128
      %s131 = sphi 0, %s130
      %s145 = sphi 0, %s131
      %s149 = sphi 0, %s149
      %s151 = sphi 0, %s149
      %s152 = sphi 0, %s151
      %s166 = sphi 0, %s152
      %s170 = sphi 0, %s170
      %s172 = sphi 0, %s170
      %s173 = sphi 0, %s172
      %s187 = sphi 0, %s173
      %s191 = sphi 0, %s191
      %s193 = sphi 0, %s191
      %s194 = sphi 0, %s193
      %s208 = sphi 0, %s194
      %s212 = sphi 0, %s212
      %s214 = sphi 0, %s212
      %s215 = sphi 0, %s214
      %s229 = sphi 0, %s215
      %s235 = sphi 0, %s237
      %s238 = sphi 0, %s235
      %s239 = sphi 0, %s238
      %s255 = sphi 0, %s239
    $region4: #{tpu_custom_call.1} parent=1 // loop_header_branch
      %24 = sbr.rel (%p22) target = $region8
    $region5: #{tpu_custom_call.1} parent=1 // loop_body
      %s26 = ssub.s32 %s21, 1
      %s27 = ssub.s32 %s21, 2
      %s28 = sadd.s32 %s21, 1
      %s29 = ssub.s32 %s21, %s28
      %p30 = scmp.eq.s32.totalorder %s29, 0
      %s32 = sadd.s32 %s31, 1
      %s33 = scalar_select %p30, %s31, %s32
      %p36 = pneg %p30
      %p37 = scmp.eq.s32.totalorder %s21, 1
      %p38 = por %p36, %p37
      %p39 = scmp.ne.s32.totalorder %s31, %s34
      %p40 = scmp.eq.s32.totalorder %s21, 0
      %p41 = por %p39, %p40
      %p42 = scmp.ne.s32.totalorder %s31, %s34
      %p43 = scmp.eq.s32.totalorder %s26, 1
      %p44 = por %p42, %p43
      %p45 = scmp.ne.s32.totalorder %s34, %s35
      %p46 = scmp.eq.s32.totalorder %s26, 0
      %p47 = por %p45, %p46
      %p48 = scmp.ne.s32.totalorder %s34, %s35
      %p49 = scmp.eq.s32.totalorder %s27, 1
      %p50 = por %p48, %p49
      %p52 = scmp.ne.s32.totalorder %s35, %s51
      %p53 = scmp.eq.s32.totalorder %s27, 0
      %p54 = por %p52, %p53
      %s55 = ssub.s32 %s21, %s28
      %p56 = scmp.eq.s32.totalorder %s55, 0
      %s58 = sadd.s32 %s57, 1
      %s59 = scalar_select %p56, %s57, %s58
      %p62 = pneg %p56
      %p63 = scmp.eq.s32.totalorder %s21, 1
      %p64 = por %p62, %p63
      %p65 = scmp.ne.s32.totalorder %s57, %s60
      %p66 = scmp.eq.s32.totalorder %s21, 0
      %p67 = por %p65, %p66
      %p68 = scmp.ne.s32.totalorder %s57, %s60
      %p69 = scmp.eq.s32.totalorder %s26, 1
      %p70 = por %p68, %p69
      %p71 = scmp.ne.s32.totalorder %s60, %s61
      %p72 = scmp.eq.s32.totalorder %s26, 0
      %p73 = por %p71, %p72
      %p74 = scmp.ne.s32.totalorder %s60, %s61
      %p75 = scmp.eq.s32.totalorder %s27, 1
      %p76 = por %p74, %p75
      %p78 = scmp.ne.s32.totalorder %s61, %s77
      %p79 = scmp.eq.s32.totalorder %s27, 0
      %p80 = por %p78, %p79
      %s81 = ssub.s32 %s21, %s28
      %p82 = scmp.eq.s32.totalorder %s81, 0
      %s84 = sadd.s32 %s83, 1
      %s85 = scalar_select %p82, %s83, %s84
      %p88 = pneg %p82
      %p89 = scmp.eq.s32.totalorder %s21, 1
      %p90 = por %p88, %p89
      %p91 = scmp.ne.s32.totalorder %s83, %s86
      %p92 = scmp.eq.s32.totalorder %s21, 0
      %p93 = por %p91, %p92
      %p94 = scmp.ne.s32.totalorder %s83, %s86
      %p95 = scmp.eq.s32.totalorder %s26, 1
      %p96 = por %p94, %p95
      %p97 = scmp.ne.s32.totalorder %s86, %s87
      %p98 = scmp.eq.s32.totalorder %s26, 0
      %p99 = por %p97, %p98
      %p100 = scmp.ne.s32.totalorder %s86, %s87
      %p101 = scmp.eq.s32.totalorder %s27, 1
      %p102 = por %p100, %p101
      %p104 = scmp.ne.s32.totalorder %s87, %s103
      %p105 = scmp.eq.s32.totalorder %s27, 0
      %p106 = por %p104, %p105
      %s108 = sadd.s32 %s107, 1
      %p111 = scmp.eq.s32.totalorder %s21, 1
      %p112 = scmp.ne.s32.totalorder %s107, %s109
      %p113 = scmp.eq.s32.totalorder %s21, 0
      %p114 = por %p112, %p113
      %p115 = scmp.ne.s32.totalorder %s107, %s109
      %p116 = scmp.eq.s32.totalorder %s26, 1
      %p117 = por %p115, %p116
      %p118 = scmp.ne.s32.totalorder %s109, %s110
      %p119 = scmp.eq.s32.totalorder %s26, 0
      %p120 = por %p118, %p119
      %p121 = scmp.ne.s32.totalorder %s109, %s110
      %p122 = scmp.eq.s32.totalorder %s27, 1
      %p123 = por %p121, %p122
      %p125 = scmp.ne.s32.totalorder %s110, %s124
      %p126 = scmp.eq.s32.totalorder %s27, 0
      %p127 = por %p125, %p126
      %s129 = sadd.s32 %s128, 1
      %p132 = scmp.eq.s32.totalorder %s21, 1
      %p133 = scmp.ne.s32.totalorder %s128, %s130
      %p134 = scmp.eq.s32.totalorder %s21, 0
      %p135 = por %p133, %p134
      %p136 = scmp.ne.s32.totalorder %s128, %s130
      %p137 = scmp.eq.s32.totalorder %s26, 1
      %p138 = por %p136, %p137
      %p139 = scmp.ne.s32.totalorder %s130, %s131
      %p140 = scmp.eq.s32.totalorder %s26, 0
      %p141 = por %p139, %p140
      %p142 = scmp.ne.s32.totalorder %s130, %s131
      %p143 = scmp.eq.s32.totalorder %s27, 1
      %p144 = por %p142, %p143
      %p146 = scmp.ne.s32.totalorder %s131, %s145
      %p147 = scmp.eq.s32.totalorder %s27, 0
      %p148 = por %p146, %p147
      %s150 = sadd.s32 %s149, 1
      %p153 = scmp.eq.s32.totalorder %s21, 1
      %p154 = scmp.ne.s32.totalorder %s149, %s151
      %p155 = scmp.eq.s32.totalorder %s21, 0
      %p156 = por %p154, %p155
      %p157 = scmp.ne.s32.totalorder %s149, %s151
      %p158 = scmp.eq.s32.totalorder %s26, 1
      %p159 = por %p157, %p158
      %p160 = scmp.ne.s32.totalorder %s151, %s152
      %p161 = scmp.eq.s32.totalorder %s26, 0
      %p162 = por %p160, %p161
      %p163 = scmp.ne.s32.totalorder %s151, %s152
      %p164 = scmp.eq.s32.totalorder %s27, 1
      %p165 = por %p163, %p164
      %p167 = scmp.ne.s32.totalorder %s152, %s166
      %p168 = scmp.eq.s32.totalorder %s27, 0
      %p169 = por %p167, %p168
      %s171 = sadd.s32 %s170, 1
      %p174 = scmp.eq.s32.totalorder %s21, 1
      %p175 = scmp.ne.s32.totalorder %s170, %s172
      %p176 = scmp.eq.s32.totalorder %s21, 0
      %p177 = por %p175, %p176
      %p178 = scmp.ne.s32.totalorder %s170, %s172
      %p179 = scmp.eq.s32.totalorder %s26, 1
      %p180 = por %p178, %p179
      %p181 = scmp.ne.s32.totalorder %s172, %s173
      %p182 = scmp.eq.s32.totalorder %s26, 0
      %p183 = por %p181, %p182
      %p184 = scmp.ne.s32.totalorder %s172, %s173
      %p185 = scmp.eq.s32.totalorder %s27, 1
      %p186 = por %p184, %p185
      %p188 = scmp.ne.s32.totalorder %s173, %s187
      %p189 = scmp.eq.s32.totalorder %s27, 0
      %p190 = por %p188, %p189
      %s192 = sadd.s32 %s191, 1
      %p195 = scmp.eq.s32.totalorder %s21, 1
      %p196 = scmp.ne.s32.totalorder %s191, %s193
      %p197 = scmp.eq.s32.totalorder %s21, 0
      %p198 = por %p196, %p197
      %p199 = scmp.ne.s32.totalorder %s191, %s193
      %p200 = scmp.eq.s32.totalorder %s26, 1
      %p201 = por %p199, %p200
      %p202 = scmp.ne.s32.totalorder %s193, %s194
      %p203 = scmp.eq.s32.totalorder %s26, 0
      %p204 = por %p202, %p203
      %p205 = scmp.ne.s32.totalorder %s193, %s194
      %p206 = scmp.eq.s32.totalorder %s27, 1
      %p207 = por %p205, %p206
      %p209 = scmp.ne.s32.totalorder %s194, %s208
      %p210 = scmp.eq.s32.totalorder %s27, 0
      %p211 = por %p209, %p210
      %s213 = sadd.s32 %s212, 1
      %p216 = scmp.eq.s32.totalorder %s21, 1
      %p217 = scmp.ne.s32.totalorder %s212, %s214
      %p218 = scmp.eq.s32.totalorder %s21, 0
      %p219 = por %p217, %p218
      %p220 = scmp.ne.s32.totalorder %s212, %s214
      %p221 = scmp.eq.s32.totalorder %s26, 1
      %p222 = por %p220, %p221
      %p223 = scmp.ne.s32.totalorder %s214, %s215
      %p224 = scmp.eq.s32.totalorder %s26, 0
      %p225 = por %p223, %p224
      %p226 = scmp.ne.s32.totalorder %s214, %s215
      %p227 = scmp.eq.s32.totalorder %s27, 1
      %p228 = por %p226, %p227
      %p230 = scmp.ne.s32.totalorder %s215, %s229
      %p231 = scmp.eq.s32.totalorder %s27, 0
      %p232 = por %p230, %p231
      %s233 = ssub.s32 %s21, %s28
      %p234 = scmp.eq.s32.totalorder %s233, 0
      %s236 = sadd.s32 %s235, 1
      %s237 = scalar_select %p234, %s235, %s236
      %p240 = pneg %p234
      %p241 = scmp.eq.s32.totalorder %s21, 1
      %p242 = por %p240, %p241
      %p243 = scmp.ne.s32.totalorder %s235, %s238
      %p244 = scmp.eq.s32.totalorder %s21, 0
      %p245 = por %p243, %p244
      %p246 = scmp.ne.s32.totalorder %s235, %s238
      %p247 = scmp.eq.s32.totalorder %s26, 1
      %p248 = por %p246, %p247
      %p249 = scmp.ne.s32.totalorder %s238, %s239
      %p250 = scmp.eq.s32.totalorder %s26, 0
      %p251 = por %p249, %p250
      %p252 = scmp.ne.s32.totalorder %s238, %s239
      %p253 = scmp.eq.s32.totalorder %s27, 1
      %p254 = por %p252, %p253
      %p256 = scmp.ne.s32.totalorder %s239, %s255
      %p257 = scmp.eq.s32.totalorder %s27, 0
      %p258 = por %p256, %p257
      %p259 = scmp.le.s32.totalorder 1, %s21
      %p260 = scmp.lt.s32.totalorder %s21, 3
      %p261 = pnand %p259, %p260
      %p262 = pneg %p261
      // Predicated region
      $region9: #{tpu_custom_call.1} parent=5 // pred_check
        _
      $region10: #{tpu_custom_call.1} parent=5 // pred_check_branch
        %264 = sbr.rel (%p261) target = $region12
      $region11: #{tpu_custom_call.1} parent=5 // pred_region
        %s265 = ssub.s32 %s21, 1
        // Predicated region
        $region13: #{tpu_custom_call.1} parent=11 // pred_check
          %p266 = pneg %p120
        $region14: #{tpu_custom_call.1} parent=11 // pred_check_branch
          %268 = sbr.rel (%p266) target = $region16
        $region15: #{tpu_custom_call.1} parent=11 // pred_region
          _
        $region16: #{tpu_custom_call.1} parent=11 // pred_fallthru
          _
        // Predicated region
        $region17: #{tpu_custom_call.1} parent=11 // pred_check
          %p269 = pneg %p141
        $region18: #{tpu_custom_call.1} parent=11 // pred_check_branch
          %271 = sbr.rel (%p269) target = $region20
        $region19: #{tpu_custom_call.1} parent=11 // pred_region
          _
        $region20: #{tpu_custom_call.1} parent=11 // pred_fallthru
          _
        // Predicated region
        $region21: #{tpu_custom_call.1} parent=11 // pred_check
          %p272 = pneg %p162
        $region22: #{tpu_custom_call.1} parent=11 // pred_check_branch
          %274 = sbr.rel (%p272) target = $region24
        $region23: #{tpu_custom_call.1} parent=11 // pred_region
          _
        $region24: #{tpu_custom_call.1} parent=11 // pred_fallthru
          _
        // Predicated region
        $region25: #{tpu_custom_call.1} parent=11 // pred_check
          %p275 = pneg %p183
        $region26: #{tpu_custom_call.1} parent=11 // pred_check_branch
          %277 = sbr.rel (%p275) target = $region28
        $region27: #{tpu_custom_call.1} parent=11 // pred_region
          _
        $region28: #{tpu_custom_call.1} parent=11 // pred_fallthru
          _
        // Predicated region
        $region29: #{tpu_custom_call.1} parent=11 // pred_check
          %p278 = pneg %p204
        $region30: #{tpu_custom_call.1} parent=11 // pred_check_branch
          %280 = sbr.rel (%p278) target = $region32
        $region31: #{tpu_custom_call.1} parent=11 // pred_region
          _
        $region32: #{tpu_custom_call.1} parent=11 // pred_fallthru
          _
        // Predicated region
        $region33: #{tpu_custom_call.1} parent=11 // pred_check
          %p281 = pneg %p225
        $region34: #{tpu_custom_call.1} parent=11 // pred_check_branch
          %283 = sbr.rel (%p281) target = $region36
        $region35: #{tpu_custom_call.1} parent=11 // pred_region
          _
        $region36: #{tpu_custom_call.1} parent=11 // pred_fallthru
          _
      $region12: #{tpu_custom_call.1} parent=5 // pred_fallthru
        _
      %p284 = scmp.lt.s32.totalorder %s21, 2
      // Predicated region
      $region37: #{tpu_custom_call.1} parent=5 // pred_check
        %p285 = pneg %p284
      $region38: #{tpu_custom_call.1} parent=5 // pred_check_branch
        %287 = sbr.rel (%p285) target = $region40
      $region39: #{tpu_custom_call.1} parent=5 // pred_region
        // Predicated region
        $region41: #{tpu_custom_call.1} parent=39 // pred_check
          %p288 = pneg %p41
        $region42: #{tpu_custom_call.1} parent=39 // pred_check_branch
          %290 = sbr.rel (%p288) target = $region44
        $region43: #{tpu_custom_call.1} parent=39 // pred_region
          %p291 = scmp.lt.s32.totalorder %s21, 1
          %s292 = scalar_select %p291, %s21, 1
          %s293 = smul.addr %s292, 2
          %s294 = smul.addr %s293, 8
          %s295 = scalar_lea.vmem %s0, %s294
        $region44: #{tpu_custom_call.1} parent=39 // pred_fallthru
          _
        // Predicated region
        $region45: #{tpu_custom_call.1} parent=39 // pred_check
          %p296 = pneg %p67
        $region46: #{tpu_custom_call.1} parent=39 // pred_check_branch
          %298 = sbr.rel (%p296) target = $region48
        $region47: #{tpu_custom_call.1} parent=39 // pred_region
          %s299 = sand.u32 %s57, 1
          %s300 = scalar_lea.sflag [#allocation3], %s299
          %s301 = sand.u32 %s57, 1
          %s302 = smul.addr %s301, 16
          %s303 = scalar_lea.vmem [#allocation2], %s302
          %s305 = ssub.s32 256, 256
          %306 = vsyncadd %s300, %s305
          %s307 = smul.addr %s21, 2
          %s308 = smul.addr %s307, 128
          %s309 = scalar_lea.hbm %s1, %s308
          %s311 = sshll.u32 %s303, 4
          %s312 = int_to_ptr.vmem [resolvable:$true] %s311
          %314 = dma.hbm_to_vmem [thread:$0]  %s309, 256, %s312, %s300
        $region48: #{tpu_custom_call.1} parent=39 // pred_fallthru
          _
        // Predicated region
        $region49: #{tpu_custom_call.1} parent=39 // pred_check
          %p315 = pneg %p93
        $region50: #{tpu_custom_call.1} parent=39 // pred_check_branch
          %317 = sbr.rel (%p315) target = $region52
        $region51: #{tpu_custom_call.1} parent=39 // pred_region
          %p318 = scmp.lt.s32.totalorder %s21, 1
          %s319 = scalar_select %p318, %s21, 1
          %s320 = smul.addr %s319, 2
          %s321 = scalar_lea.vmem %s2, %s320
        $region52: #{tpu_custom_call.1} parent=39 // pred_fallthru
          _
      $region40: #{tpu_custom_call.1} parent=5 // pred_fallthru
        _
      %p322 = scmp.le.s32.totalorder 1, %s21
      %p323 = scmp.lt.s32.totalorder %s21, 3
      %p324 = pnand %p322, %p323
      %p325 = pneg %p324
      // Predicated region
      $region53: #{tpu_custom_call.1} parent=5 // pred_check
        _
      $region54: #{tpu_custom_call.1} parent=5 // pred_check_branch
        %327 = sbr.rel (%p324) target = $region56
      $region55: #{tpu_custom_call.1} parent=5 // pred_region
        %s328 = ssub.s32 %s21, 1
        %s329 = sand.u32 %s60, 1
        %s330 = scalar_lea.sflag [#allocation3], %s329
        %s331 = sand.u32 %s60, 1
        %s332 = smul.addr %s331, 16
        %s333 = scalar_lea.vmem [#allocation2], %s332
        // Predicated region
        $region57: #{tpu_custom_call.1} parent=55 // pred_check
          %p334 = pneg %p73
        $region58: #{tpu_custom_call.1} parent=55 // pred_check_branch
          %336 = sbr.rel (%p334) target = $region60
        $region59: #{tpu_custom_call.1} parent=55 // pred_region
          %337 = dma.done %s330, 256
        $region60: #{tpu_custom_call.1} parent=55 // pred_fallthru
          _
        %p338 = scmp.lt.s32.totalorder %s26, 1
        %s339 = scalar_select %p338, %s26, 1
        %s340 = smul.addr %s339, 2
        %s341 = smul.addr %s340, 8
        %s342 = scalar_lea.vmem %s0, %s341
        %p343 = pneg %p47
        %p344 = pneg %p44
        %s345 = sand.u32 %s60, 1
        %s346 = scalar_lea.sflag [#allocation3], %s345
        %s347 = sand.u32 %s60, 1
        %s348 = smul.addr %s347, 16
        %s349 = scalar_lea.vmem [#allocation2], %s348
        %p350 = pneg %p73
        %p351 = pneg %p70
        %p352 = scmp.lt.s32.totalorder %s26, 1
        %s353 = scalar_select %p352, %s26, 1
        %s354 = smul.addr %s353, 2
        %s355 = scalar_lea.vmem %s2, %s354
        %p356 = pneg %p99
        %p357 = pneg %p96
        %p358 = pneg %p120
        %p359 = pneg %p117
        %p360 = pneg %p141
        %p361 = pneg %p138
        %p362 = pneg %p162
        %p363 = pneg %p159
        %p364 = pneg %p183
        %p365 = pneg %p180
        %p366 = pneg %p204
        %p367 = pneg %p201
        %p368 = pneg %p225
        %p369 = pneg %p222
        %p370 = pneg %p251
        %p371 = pneg %p248
        %s372 = sand.u32 %s238, 1
        %s373 = scalar_lea.sflag [#allocation4], %s372
        %s374 = sand.u32 %s238, 1
        %s375 = smul.addr %s374, 16
        %s376 = scalar_lea.vmem [#allocation5], %s375
        %p377 = scmp.lt.s32.totalorder %s26, 1
        %s378 = scalar_select %p377, %s26, 1
        %s379 = smul.addr %s378, 2
        %s380 = smul.addr %s379, 8
        %s381 = scalar_lea.vmem %s0, %s380
        %p382 = scmp.lt.s32.totalorder %s26, 1
        %s383 = scalar_select %p382, %s26, 1
        %s384 = smul.addr %s383, 2
        %s385 = scalar_lea.vmem %s2, %s384
        %v386 = vld [vmem:[%s381] sm:$0xff]
        %v387 = vld [vmem:[%s381 + $0x8] sm:$0xff]
        %v388 = vld [vmem:[%s333] sm:$0xff]
        %v389 = vld [vmem:[%s333 + $0x8] sm:$0xff]
        %v390 = vld [vmem:[%s385] sm:$0x3]
        %v392 = vlaneseq
        %v393 = vshrl.u32 %v392, 7
        %v394 = vsub.s32 0, %v393
        %v395 = vrot.slane %v390, %v394
        %v396 = vlaneseq
        %v397 = vshrl.u32 %v396, 7
        %v398 = vsub.s32 1, %v397
        %v399 = vrot.slane %v390, %v398
        %v402 = vmul.f32 %v386, %v395
        %v403 = vmul.f32 %v387, %v399
        %v404 = vsub.f32 %v388, %v395
        %v405 = vsub.f32 %v389, %v399
        %v406 = vadd.f32 %v402, %v404
        %v407 = vadd.f32 %v403, %v405
        %v408 = vadd.f32 %v406, %v407
        %409 = vadd.xlane.f32.xlu0 %v408
        %v410 = vpop.xlane.xlu0 %409
        %v411 = vmul.f32 %v410, 0.00390625
        %v412 = vld [vmem:[%s3] sm:$0xff]
        %v413 = vmul.f32 %v412, %v411
        %vm414 = vcmask 31744
        %v415 = vsel %vm414, %v413, 0.0
        %v416 = vrot.slane %v415, 4
        %v417 = vadd.f32 %v415, %v416
        %v418 = vrot.slane %v417, 2
        %v419 = vadd.f32 %v417, %v418
        %v420 = vrot.slane %v419, 1
        %v421 = vadd.f32 %v419, %v420
        %v422 = vld [vmem:[%s4] sm:$0x1]
        %v423 = vadd.f32 %v421, %v422
        %v424 = vld [vmem:[%s5] sm:$0xff]
        %v425 = vlaneseq
        %v426 = vshrl.u32 %v425, 7
        %v427 = vsub.s32 0, %v426
        %v428 = vrot.slane %v423, %v427
        %v429 = vmul.f32 %v424, %v428
        %v430 = vsel %vm414, %v429, 0.0
        %431 = vadd.xlane.f32.xlu0 %v430
        %v432 = vpop.xlane.xlu0 %431
        %v433 = vld [vmem:[%s6] sm:$0xff]
        %v434 = vadd.f32 %v432, %v433
        %v435 = vld [vmem:[%s7] sm:$0xff]
        %v436 = vmul.f32 %v435, %v428
        %v437 = vsel %vm414, %v436, 0.0
        %438 = vadd.xlane.f32.xlu0 %v437
        %v439 = vpop.xlane.xlu0 %438
        %v440 = vld [vmem:[%s8] sm:$0xff]
        %v441 = vadd.f32 %v439, %v440
        %v442 = vmax.f32 %v434, %v441
        %v443 = vsub.f32 %v434, %v442
        %v444 = vmul.f32 %v443, 1.442695
        %v445 = vpow.pop %v444
        %v446 = vsub.f32 %v441, %v442
        %v447 = vmul.f32 %v446, 1.442695
        %v448 = vpow.pop %v447
        %v449 = vadd.f32 %v445, %v448
        %v450 = vrcp.pop %v449
        %v451 = vmul.f32 %v445, %v450
        %v452 = vmul.f32 %v448, %v450
        %454 = vset.pattern.permute.xlu0 0
        %455 = vperm.xlu0 %454, %v451
        %v456 = vpop.permute.xlu0 %455
        %v458 = vmul.f32 %v402, %v456
        %v459 = vmul.f32 %v403, %v456
        %461 = vset.pattern.permute.xlu0 0
        %462 = vperm.xlu0 %461, %v452
        %v463 = vpop.permute.xlu0 %462
        %v465 = vmul.f32 %v404, %v463
        %v466 = vmul.f32 %v405, %v463
        %v467 = vadd.f32 %v458, %v465
        %v468 = vadd.f32 %v459, %v466
        %469 = vst [vmem:[%s376] sm:$0xff] %v467
        %470 = vst [vmem:[%s376 + $0x8] sm:$0xff] %v468
        %s471 = sand.u32 %s238, 1
        %s472 = scalar_lea.sflag [#allocation4], %s471
        %s473 = sand.u32 %s238, 1
        %s474 = smul.addr %s473, 16
        %s475 = scalar_lea.vmem [#allocation5], %s474
        // Predicated region
        $region61: #{tpu_custom_call.1} parent=55 // pred_check
          %p476 = pneg %p248
        $region62: #{tpu_custom_call.1} parent=55 // pred_check_branch
          %478 = sbr.rel (%p476) target = $region64
        $region63: #{tpu_custom_call.1} parent=55 // pred_region
          %s480 = ssub.s32 256, 256
          %481 = vsyncadd %s472, %s480
          %s482 = smul.addr %s26, 2
          %s483 = smul.addr %s482, 128
          %s484 = scalar_lea.hbm %s9, %s483
          %s486 = sshll.u32 %s475, 4
          %s487 = int_to_ptr.vmem [resolvable:$true] %s486
          %489 = dma.vmem_to_hbm [thread:$0]  %s487, 256, %s484, %s472
        $region64: #{tpu_custom_call.1} parent=55 // pred_fallthru
          _
      $region56: #{tpu_custom_call.1} parent=5 // pred_fallthru
        _
      %p490 = scmp.le.s32.totalorder 2, %s21
      // Predicated region
      $region65: #{tpu_custom_call.1} parent=5 // pred_check
        %p491 = pneg %p490
      $region66: #{tpu_custom_call.1} parent=5 // pred_check_branch
        %493 = sbr.rel (%p491) target = $region68
      $region67: #{tpu_custom_call.1} parent=5 // pred_region
        %s494 = ssub.s32 %s21, 2
        // Predicated region
        $region69: #{tpu_custom_call.1} parent=67 // pred_check
          %p495 = pneg %p254
        $region70: #{tpu_custom_call.1} parent=67 // pred_check_branch
          %497 = sbr.rel (%p495) target = $region72
        $region71: #{tpu_custom_call.1} parent=67 // pred_region
          %s498 = sand.u32 %s239, 1
          %s499 = scalar_lea.sflag [#allocation4], %s498
          %s500 = sand.u32 %s239, 1
          %s501 = smul.addr %s500, 16
          %s502 = scalar_lea.vmem [#allocation5], %s501
          %503 = dma.done %s499, 256
        $region72: #{tpu_custom_call.1} parent=67 // pred_fallthru
          _
      $region68: #{tpu_custom_call.1} parent=5 // pred_fallthru
        _
    $region6: #{tpu_custom_call.1} parent=1 // loop_footer
      %s25 = sadd.s32 1, %s21
    $region7: #{tpu_custom_call.1} parent=1 // loop_footer_branch
      %20 = sbr.rel target = $region3
    $region8: #{tpu_custom_call.1} parent=1 // loop_exit
      _
    %504 = vsyncpa [#allocation3], 1
    %s505 = scalar_lea.sflag [#allocation3], 1
    %506 = vsyncpa %s505, 1
    %507 = vsyncpa [#allocation4], 1
    %s508 = scalar_lea.sflag [#allocation4], 1
    %509 = vsyncpa %s508, 1

</llo_original>
